<compile_context>
chip_gen: v5e
topology: v5e:2x2
jax: 0.10.0
libtpu: 0.0.40
codegen_flags: <defaults>
</compile_context>

<pallas_src>
import functools

import jax
import jax.numpy as jnp
from jax.experimental import pallas as pl
from jax.experimental.pallas import tpu as pltpu


# ----------------------------------------------------------------------------
# Kernel: entire token sequence in one invocation
# ----------------------------------------------------------------------------
def gru_encoder_kernel(x_ref,        # (T, Hp)   gathered embeddings (param dtype)
                       h0_ref,       # (1, Hp)   initial hidden, f32, padded lanes = 0
                       w_ih_ref,     # (Hp, 3Hp) W_ih^T, gate-major [r|z|n], padded
                       w_hh_ref,     # (Hp, 3Hp) W_hh^T, gate-major [r|z|n], padded
                       bias_i_ref,   # (1, 3Hp)  f32: [b_ih_r+b_hh_r | b_ih_z+b_hh_z | b_ih_n]
                       b_hh_n_ref,   # (1, Hp)   f32: b_hh_n
                       out_ref,      # (T, Hp)   f32 per-step hidden/output rows
                       gi_scr,       # VMEM (T, 3Hp) f32: precomputed input gates
                       h_scr,        # VMEM (1, Hp)  f32: hidden carry
                       *, n_layers, seq_len, hidden_pad):
    Hp = hidden_pad

    w_ih = w_ih_ref[...]                       # resident in VMEM for the whole kernel
    w_hh = w_hh_ref[...]
    bias_i = bias_i_ref[...]
    b_hh_n = b_hh_n_ref[...]

    # Pre-pass: one (T, Hp) @ (Hp, 3Hp) MXU matmul for ALL non-recurrent input
    # gates of layer 0 (off the serial recurrence).
    gi_scr[...] = (
        jnp.dot(x_ref[...], w_ih, preferred_element_type=jnp.float32) + bias_i)

    h_scr[...] = h0_ref[...].astype(jnp.float32)

    def gru_cell(gi, h):
        # gi already contains b_ih (+ b_hh for r/z); gh has no bias except b_hh_n below.
        gh = jnp.dot(h.astype(w_hh.dtype), w_hh, preferred_element_type=jnp.float32)
        r = jax.nn.sigmoid(gi[:, 0:Hp] + gh[:, 0:Hp])
        z = jax.nn.sigmoid(gi[:, Hp:2 * Hp] + gh[:, Hp:2 * Hp])
        n = jnp.tanh(gi[:, 2 * Hp:3 * Hp] + r * (gh[:, 2 * Hp:3 * Hp] + b_hh_n))
        return (1.0 - z) * n + z * h

    @pl.loop(0, seq_len)
    def _(t):
        h = h_scr[...]                                     # (1, Hp) f32
        gi0 = gi_scr[pl.ds(t, 1), :]                       # layer-0 input gates (precomputed)
        h = gru_cell(gi0, h)
        # Layers >= 1 reuse the SAME GRU weights with x == h (seq_len == 1 in the
        # module), so gi must be recomputed per layer.  n_layers is a small static
        # hyper-parameter; a Python loop is fine here (neutral at n_layers <= 2).
        for _ in range(n_layers - 1):
            gi = (jnp.dot(h.astype(w_ih.dtype), w_ih,
                          preferred_element_type=jnp.float32) + bias_i)
            h = gru_cell(gi, h)
        h_scr[...] = h
        out_ref[pl.ds(t, 1), :] = h


# ----------------------------------------------------------------------------
# Parameter preparation (one-time; hoisted out of the forward path)
# ----------------------------------------------------------------------------
def prepare_encoder_params(params, *, param_dtype=jnp.bfloat16, lane=128):
    """Transpose, gate-pad to a multiple of 128 lanes, fold biases, cast weights."""
    H = params["embedding"].shape[1]
    Hp = ((H + lane - 1) // lane) * lane

    def pad_gate_mat(w):            # w: (3H, H) PyTorch layout, gates [r, z, n]
        w_t = jnp.transpose(w)      # (H, 3H), columns grouped by gate
        blocks = []
        for g in range(3):
            blk = w_t[:, g * H:(g + 1) * H]                       # (H, H)
            blocks.append(jnp.pad(blk, ((0, Hp - H), (0, Hp - H))))
        return jnp.concatenate(blocks, axis=1)                    # (Hp, 3Hp)

    def pad_gate_vec(b):            # b: (3H,) -> (1, 3Hp), zero-padded per gate
        parts = [jnp.pad(b[g * H:(g + 1) * H], (0, Hp - H)) for g in range(3)]
        return jnp.concatenate(parts).reshape(1, 3 * Hp)

    b_ih_p = pad_gate_vec(params["b_ih"].astype(jnp.float32))
    b_hh_p = pad_gate_vec(params["b_hh"].astype(jnp.float32))
    # Fold b_hh into the r/z gate biases; keep b_hh_n separate (needed inside r*(...)).
    bias_i = jnp.concatenate(
        [b_ih_p[:, :2 * Hp] + b_hh_p[:, :2 * Hp], b_ih_p[:, 2 * Hp:]], axis=1)
    b_hh_n = b_hh_p[:, 2 * Hp:3 * Hp]

    emb_p = jnp.pad(params["embedding"], ((0, 0), (0, Hp - H)))

    return {
        "hidden_size": H,
        "hidden_pad": Hp,
        "embedding": emb_p.astype(param_dtype),                   # (V, Hp)
        "w_ih_t": pad_gate_mat(params["w_ih"]).astype(param_dtype),   # (Hp, 3Hp)
        "w_hh_t": pad_gate_mat(params["w_hh"]).astype(param_dtype),   # (Hp, 3Hp)
        "bias_i": bias_i.astype(jnp.float32),                     # (1, 3Hp)
        "b_hh_n": b_hh_n.astype(jnp.float32),                     # (1, Hp)
    }


# ----------------------------------------------------------------------------
# Wrappers
# ----------------------------------------------------------------------------
def encoder_gru_sequence(tokens, hidden, prepared, *, n_layers=1):
    """Run the encoder over a whole token sequence in ONE kernel invocation.

    tokens:  int32 (T,) token ids
    hidden:  (1, 1, H) initial hidden
    Returns: (outputs (T, H), final_hidden (1, H)).
    Each step is exactly one EncoderGRU.forward() of the PyTorch module.
    """
    H = prepared["hidden_size"]
    Hp = prepared["hidden_pad"]
    T = int(tokens.shape[0])

    # One-time lane-dense gather of all embedding rows (no per-step 64-byte DMAs).
    x = jnp.take(prepared["embedding"], tokens.astype(jnp.int32), axis=0)      # (T, Hp)
    h0 = jnp.zeros((1, Hp), jnp.float32).at[:, :H].set(
        hidden.reshape(1, H).astype(jnp.float32))

    out_pad = pl.pallas_call(
        functools.partial(gru_encoder_kernel,
                          n_layers=n_layers, seq_len=T, hidden_pad=Hp),
        out_shape=jax.ShapeDtypeStruct((T, Hp), jnp.float32),
        scratch_shapes=[pltpu.VMEM((T, 3 * Hp), jnp.float32),     # precomputed GI
                        pltpu.VMEM((1, Hp), jnp.float32)],        # hidden carry
        compiler_params=pltpu.CompilerParams(
            vmem_limit_bytes=32 * 1024 * 1024),
    )(x, h0, prepared["w_ih_t"], prepared["w_hh_t"],
      prepared["bias_i"], prepared["b_hh_n"])

    outs = out_pad[:, :H]
    return outs, outs[T - 1:T]


def encoder_gru_forward(token, hidden, prepared, *, n_layers=1):
    """Single-token module-equivalent forward: returns (output, hidden), each (1,1,H)."""
    H = prepared["hidden_size"]
    outs, h_final = encoder_gru_sequence(token.reshape(1), hidden, prepared,
                                         n_layers=n_layers)
    return outs.reshape(1, 1, H), h_final.reshape(1, 1, H)


# ----------------------------------------------------------------------------
# Pure-JAX reference (PyTorch GRU math, original f32 params)
# ----------------------------------------------------------------------------
def reference_forward(token, hidden, params, *, n_layers=1):
    H = params["embedding"].shape[1]
    x = params["embedding"][token[0]][None, :].astype(jnp.float32)
    h = hidden.reshape(1, H).astype(jnp.float32)
    w_ih, w_hh = params["w_ih"], params["w_hh"]
    b_ih, b_hh = params["b_ih"], params["b_hh"]
    for _ in range(n_layers):
        gi = x @ w_ih.T + b_ih
        gh = h @ w_hh.T + b_hh
        i_r, i_z, i_n = gi[:, 0:H], gi[:, H:2 * H], gi[:, 2 * H:3 * H]
        h_r, h_z, h_n = gh[:, 0:H], gh[:, H:2 * H], gh[:, 2 * H:3 * H]
        r = jax.nn.sigmoid(i_r + h_r)
        z = jax.nn.sigmoid(i_z + h_z)
        n = jnp.tanh(i_n + r * h_n)
        h = (1.0 - z) * n + z * h
        x = h
    return x.reshape(1, 1, H), h.reshape(1, 1, H)


def reference_sequence(tokens, hidden, params, *, n_layers=1):
    H = params["embedding"].shape[1]
    outs = []
    h = hidden
    for t in range(tokens.shape[0]):
        o, h = reference_forward(tokens[t:t + 1], h, params, n_layers=n_layers)
        outs.append(o.reshape(1, H))
    return jnp.concatenate(outs, axis=0), h.reshape(1, H)


# ----------------------------------------------------------------------------
# Demo / self-check
# ----------------------------------------------------------------------------
if __name__ == "__main__":
    input_size = 10      # vocab size
    hidden_size = 32     # H (padded to 128 lanes inside prepare_encoder_params)
    seq_len = 8          # T (processed in one kernel invocation)

    key = jax.random.PRNGKey(0)
    k_emb, k_wih, k_whh, k_bih, k_bhh, k_tok = jax.random.split(key, 6)

    scale = 1.0 / jnp.sqrt(hidden_size)   # PyTorch GRU default init range
    params = {
        "embedding": jax.random.normal(k_emb, (input_size, hidden_size), jnp.float32),
        "w_ih": jax.random.uniform(k_wih, (3 * hidden_size, hidden_size),
                                   jnp.float32, -scale, scale),
        "w_hh": jax.random.uniform(k_whh, (3 * hidden_size, hidden_size),
                                   jnp.float32, -scale, scale),
        "b_ih": jax.random.uniform(k_bih, (3 * hidden_size,),
                                   jnp.float32, -scale, scale),
        "b_hh": jax.random.uniform(k_bhh, (3 * hidden_size,),
                                   jnp.float32, -scale, scale),
    }

    tokens = jax.random.randint(k_tok, (seq_len,), 0, input_size, jnp.int32)
    hidden0 = jnp.zeros((1, 1, hidden_size), jnp.float32)   # EncoderGRU.initHidden()

    prep_f32 = prepare_encoder_params(params, param_dtype=jnp.float32)
    prep_bf16 = prepare_encoder_params(params)               # default bfloat16 weights

    # --- 1) Single-token forward (exact module semantics), f32 weights, tight tol.
    out1, hid1 = encoder_gru_forward(tokens[:1], hidden0, prep_f32, n_layers=1)
    out1, hid1 = jax.block_until_ready((out1, hid1))
    ref_out1, ref_hid1 = reference_forward(tokens[:1], hidden0, params, n_layers=1)
    assert out1.shape == (1, 1, hidden_size) and hid1.shape == (1, 1, hidden_size)
    assert jnp.allclose(out1, ref_out1, atol=1e-5, rtol=1e-5)
    assert jnp.allclose(hid1, ref_hid1, atol=1e-5, rtol=1e-5)

    # --- 2) Whole sequence in one kernel invocation, f32 weights, tight tol.
    outs_f32, hfin_f32 = encoder_gru_sequence(tokens, hidden0, prep_f32, n_layers=1)
    outs_f32, hfin_f32 = jax.block_until_ready((outs_f32, hfin_f32))
    ref_outs, ref_hfin = reference_sequence(tokens, hidden0, params, n_layers=1)
    assert outs_f32.shape == (seq_len, hidden_size)
    assert jnp.allclose(outs_f32, ref_outs, atol=1e-5, rtol=1e-5)
    assert jnp.allclose(hfin_f32, ref_hfin, atol=1e-5, rtol=1e-5)

    # --- 3) Default bf16 resident weights (f32 MXU accumulation), loose tol.
    outs_bf16, hfin_bf16 = encoder_gru_sequence(tokens, hidden0, prep_bf16, n_layers=1)
    outs_bf16, hfin_bf16 = jax.block_until_ready((outs_bf16, hfin_bf16))
    assert jnp.allclose(outs_bf16, ref_outs, atol=3e-2, rtol=3e-2)
    assert jnp.allclose(hfin_bf16, ref_hfin, atol=3e-2, rtol=3e-2)

    # --- 4) n_layers = 2 (same GRU re-applied), f32 weights, tight tol.
    outs_l2, hfin_l2 = encoder_gru_sequence(tokens, hidden0, prep_f32, n_layers=2)
    outs_l2, hfin_l2 = jax.block_until_ready((outs_l2, hfin_l2))
    ref_outs_l2, ref_hfin_l2 = reference_sequence(tokens, hidden0, params, n_layers=2)
    assert jnp.allclose(outs_l2, ref_outs_l2, atol=1e-5, rtol=1e-5)
    assert jnp.allclose(hfin_l2, ref_hfin_l2, atol=1e-5, rtol=1e-5)

    print("KERNEL_OK")
</pallas_src>

<mosaic_0001>
module attributes {stable_mosaic.version = 11 : i64} {
  func.func @gru_encoder_kernel(%arg0: memref<1x128xf32, #tpu.memory_space<vmem>>, %arg1: memref<1x128xf32, #tpu.memory_space<vmem>>, %arg2: memref<128x384xf32, #tpu.memory_space<vmem>>, %arg3: memref<128x384xf32, #tpu.memory_space<vmem>>, %arg4: memref<1x384xf32, #tpu.memory_space<vmem>>, %arg5: memref<1x128xf32, #tpu.memory_space<vmem>>, %arg6: memref<1x128xf32, #tpu.memory_space<vmem>>, %arg7: memref<1x384xf32, #tpu.memory_space<vmem>>, %arg8: memref<1x128xf32, #tpu.memory_space<vmem>>) attributes {dimension_semantics = [], scalar_prefetch = 0 : i64, scratch_operands = 2 : i64, tpu.core_type = #tpu.core_type<tc>} {
    %c0 = arith.constant 0 : index
    %c0_0 = arith.constant 0 : index
    %0 = vector.load %arg2[%c0, %c0_0] : memref<128x384xf32, #tpu.memory_space<vmem>>, vector<128x384xf32>
    %c0_1 = arith.constant 0 : index
    %c0_2 = arith.constant 0 : index
    %1 = vector.load %arg3[%c0_1, %c0_2] : memref<128x384xf32, #tpu.memory_space<vmem>>, vector<128x384xf32>
    %c0_3 = arith.constant 0 : index
    %c0_4 = arith.constant 0 : index
    %2 = vector.load %arg4[%c0_3, %c0_4] : memref<1x384xf32, #tpu.memory_space<vmem>>, vector<1x384xf32>
    %c0_5 = arith.constant 0 : index
    %c0_6 = arith.constant 0 : index
    %3 = vector.load %arg5[%c0_5, %c0_6] : memref<1x128xf32, #tpu.memory_space<vmem>>, vector<1x128xf32>
    %c0_7 = arith.constant 0 : index
    %c0_8 = arith.constant 0 : index
    %4 = vector.load %arg0[%c0_7, %c0_8] : memref<1x128xf32, #tpu.memory_space<vmem>>, vector<1x128xf32>
    %cst = arith.constant dense<0.000000e+00> : vector<1x384xf32>
    %5 = tpu.matmul %4, %0, %cst {dimension_numbers = #tpu.dot_dimension_numbers<[1], [0], [0], [1], [0, 0, 1, 1], [], []>} : vector<1x128xf32>, vector<128x384xf32>, vector<1x384xf32> -> vector<1x384xf32>
    %6 = arith.addf %5, %2 : vector<1x384xf32>
    %c0_9 = arith.constant 0 : index
    %c0_10 = arith.constant 0 : index
    %7 = vector.load %arg7[%c0_9, %c0_10] : memref<1x384xf32, #tpu.memory_space<vmem>>, vector<1x384xf32>
    tpu.vector_store %arg7[%c0_9, %c0_10], %6 {strides = array<i32>} : memref<1x384xf32, #tpu.memory_space<vmem>>, vector<1x384xf32>,
    %c0_11 = arith.constant 0 : index
    %c0_12 = arith.constant 0 : index
    %8 = vector.load %arg1[%c0_11, %c0_12] : memref<1x128xf32, #tpu.memory_space<vmem>>, vector<1x128xf32>
    %c0_13 = arith.constant 0 : index
    %c0_14 = arith.constant 0 : index
    %9 = vector.load %arg8[%c0_13, %c0_14] : memref<1x128xf32, #tpu.memory_space<vmem>>, vector<1x128xf32>
    tpu.vector_store %arg8[%c0_13, %c0_14], %8 {strides = array<i32>} : memref<1x128xf32, #tpu.memory_space<vmem>>, vector<1x128xf32>,
    %c0_i32 = arith.constant 0 : i32
    %c1_i32 = arith.constant 1 : i32
    %10 = arith.muli %c0_i32, %c1_i32 : i32
    %c0_i32_15 = arith.constant 0 : i32
    %11 = arith.addi %c0_i32_15, %10 : i32
    %c0_16 = arith.constant 0 : index
    %c0_17 = arith.constant 0 : index
    %12 = vector.load %arg8[%c0_16, %c0_17] : memref<1x128xf32, #tpu.memory_space<vmem>>, vector<1x128xf32>
    %13 = arith.index_cast %11 : i32 to index
    %c0_18 = arith.constant 0 : index
    %14 = vector.load %arg7[%13, %c0_18] : memref<1x384xf32, #tpu.memory_space<vmem>>, vector<1x384xf32>
    %cst_19 = arith.constant dense<0.000000e+00> : vector<1x384xf32>
    %15 = tpu.matmul %12, %1, %cst_19 {dimension_numbers = #tpu.dot_dimension_numbers<[1], [0], [0], [1], [0, 0, 1, 1], [], []>} : vector<1x128xf32>, vector<128x384xf32>, vector<1x384xf32> -> vector<1x384xf32>
    %16 = vector.extract_strided_slice %14 {offsets = [0, 0], sizes = [1, 128], strides = [1, 1]} : vector<1x384xf32> to vector<1x128xf32>
    %17 = vector.extract_strided_slice %15 {offsets = [0, 0], sizes = [1, 128], strides = [1, 1]} : vector<1x384xf32> to vector<1x128xf32>
    %18 = arith.addf %16, %17 : vector<1x128xf32>
    %19 = arith.negf %18 : vector<1x128xf32>
    %20 = math.exp %19 : vector<1x128xf32>
    %cst_20 = arith.constant 1.000000e+00 : f32
    %21 = vector.broadcast %cst_20 : f32 to vector<1x128xf32>
    %22 = arith.addf %21, %20 : vector<1x128xf32>
    %23 = arith.divf %21, %22 : vector<1x128xf32>
    %24 = vector.extract_strided_slice %14 {offsets = [0, 128], sizes = [1, 128], strides = [1, 1]} : vector<1x384xf32> to vector<1x128xf32>
    %25 = vector.extract_strided_slice %15 {offsets = [0, 128], sizes = [1, 128], strides = [1, 1]} : vector<1x384xf32> to vector<1x128xf32>
    %26 = arith.addf %24, %25 : vector<1x128xf32>
    %27 = arith.negf %26 : vector<1x128xf32>
    %28 = math.exp %27 : vector<1x128xf32>
    %cst_21 = arith.constant 1.000000e+00 : f32
    %29 = vector.broadcast %cst_21 : f32 to vector<1x128xf32>
    %30 = arith.addf %29, %28 : vector<1x128xf32>
    %31 = arith.divf %29, %30 : vector<1x128xf32>
    %32 = vector.extract_strided_slice %14 {offsets = [0, 256], sizes = [1, 128], strides = [1, 1]} : vector<1x384xf32> to vector<1x128xf32>
    %33 = vector.extract_strided_slice %15 {offsets = [0, 256], sizes = [1, 128], strides = [1, 1]} : vector<1x384xf32> to vector<1x128xf32>
    %34 = arith.addf %33, %3 : vector<1x128xf32>
    %35 = arith.mulf %23, %34 : vector<1x128xf32>
    %36 = arith.addf %32, %35 : vector<1x128xf32>
    %37 = math.tanh %36 : vector<1x128xf32>
    %cst_22 = arith.constant 1.000000e+00 : f32
    %38 = vector.broadcast %cst_22 : f32 to vector<1x128xf32>
    %39 = arith.subf %38, %31 : vector<1x128xf32>
    %40 = arith.mulf %39, %37 : vector<1x128xf32>
    %41 = arith.mulf %31, %12 : vector<1x128xf32>
    %42 = arith.addf %40, %41 : vector<1x128xf32>
    %c0_23 = arith.constant 0 : index
    %c0_24 = arith.constant 0 : index
    %43 = vector.load %arg8[%c0_23, %c0_24] : memref<1x128xf32, #tpu.memory_space<vmem>>, vector<1x128xf32>
    tpu.vector_store %arg8[%c0_23, %c0_24], %42 {strides = array<i32>} : memref<1x128xf32, #tpu.memory_space<vmem>>, vector<1x128xf32>,
    %44 = arith.index_cast %11 : i32 to index
    %c0_25 = arith.constant 0 : index
    %45 = vector.load %arg6[%44, %c0_25] : memref<1x128xf32, #tpu.memory_space<vmem>>, vector<1x128xf32>
    tpu.vector_store %arg6[%44, %c0_25], %42 {strides = array<i32>} : memref<1x128xf32, #tpu.memory_space<vmem>>, vector<1x128xf32>,
    %c1_i32_26 = arith.constant 1 : i32
    return
  }
}

</mosaic_0001>

<llo_original>
// kernel: tpu_custom_call.1
$region0: #{tpu_custom_call.1}
  #allocation0 [shape = 'u32[]', space=smem, size = 0x4, offset = 0x4, fixed_abs, tag = 'smem constant byte address 0x4 - core index']
  #allocation1 [shape = 'u32[72,128]{1,0:T(1,128)}', space=vmem, size = 0x9000, scoped, tag = 'internal scratch']
  #allocation2 [shape = 'f32[1,384]{1,0:T(1,128)}', space=vmem, size = 0x600, scoped, tag = 'scratch operand']
  #allocation3 [shape = 'f32[1,128]{1,0:T(1,128)}', space=vmem, size = 0x200, scoped, tag = 'scratch operand']
  %s0 = inlined_call_operand.hbm [shape: f32[1,128], index: 0, kind: input, shape index: {}]
  %s1 = inlined_call_operand.hbm [shape: f32[1,128], index: 1, kind: input, shape index: {}]
  %s2 = inlined_call_operand.hbm [shape: f32[128,384], index: 2, kind: input, shape index: {}]
  %s3 = inlined_call_operand.hbm [shape: f32[128,384], index: 3, kind: input, shape index: {}]
  %s4 = inlined_call_operand.vmem [shape: f32[1,384], index: 4, kind: input, shape index: {}]
  %s5 = inlined_call_operand.vmem [shape: f32[1,128], index: 5, kind: input, shape index: {}]
  %s6 = inlined_call_operand.hbm [shape: f32[1,128], index: 6, kind: output, shape index: {}]
  %s7 = sld [smem:[#allocation0]]
  $region50: #{tpu_custom_call.1} parent=0
    _
  %s9 = ssub.s32 1, %s7
  %s10 = scalar_select 0, %s9, %s7
  $region1: #{tpu_custom_call.1} parent=0
    #allocation4 [shape = 'u8[512]{0}', space=vmem, size = 0x400, scoped, tag = 'input window, operand 0, single buffered']
    #allocation5 [shape = 's32[1]{0}', space=sflag, size = 0x4, scoped, tag = 'scoped memory for tpu_custom_call.1']
    #allocation6 [shape = 's32[1]{0}', space=sflag, size = 0x4, scoped, tag = 'scoped memory for tpu_custom_call.1']
    #allocation7 [shape = 'u8[512]{0}', space=vmem, size = 0x400, scoped, tag = 'input window, operand 1, single buffered']
    #allocation8 [shape = 's32[1]{0}', space=sflag, size = 0x4, scoped, tag = 'scoped memory for tpu_custom_call.1']
    #allocation9 [shape = 'u8[196608]{0}', space=vmem, size = 0x30000, scoped, tag = 'input window, operand 2, single buffered']
    #allocation10 [shape = 'u8[196608]{0}', space=vmem, size = 0x30000, scoped, tag = 'input window, operand 3, single buffered']
    #allocation11 [shape = 's32[1]{0}', space=sflag, size = 0x4, scoped, tag = 'scoped memory for tpu_custom_call.1']
    #allocation12 [shape = 'u8[512]{0}', space=vmem, size = 0x400, scoped, tag = 'output window, operand 0, single buffered']
    %11 = vsyncpa [#allocation5], 0
    %12 = vsyncpa [#allocation8], 0
    %13 = vsyncpa [#allocation11], 0
    %14 = vsyncpa [#allocation6], 0
    // Predicated region
    $region2: #{tpu_custom_call.1} parent=1 // pred_check
      _
    $region3: #{tpu_custom_call.1} parent=1 // pred_check_branch
      %16 = sbr.rel (0) target = $region5
    $region4: #{tpu_custom_call.1} parent=1 // pred_region
      %18 = vsyncadd [#allocation5], 0
      %s20 = sshll.u32 %s0, 4
      %s21 = int_to_ptr.hbm [resolvable:$true] %s20
      %s22 = sshll.u32 [#allocation4], 4
      %s23 = int_to_ptr.vmem [resolvable:$true] %s22
      %25 = dma.hbm_to_vmem [thread:$0]  %s21, 16, %s23, [#allocation5]
    $region5: #{tpu_custom_call.1} parent=1 // pred_fallthru
      _
    // Predicated region
    $region6: #{tpu_custom_call.1} parent=1 // pred_check
      _
    $region7: #{tpu_custom_call.1} parent=1 // pred_check_branch
      %27 = sbr.rel (0) target = $region9
    $region8: #{tpu_custom_call.1} parent=1 // pred_region
      %29 = vsyncadd [#allocation8], 0
      %s31 = sshll.u32 %s1, 4
      %s32 = int_to_ptr.hbm [resolvable:$true] %s31
      %s33 = sshll.u32 [#allocation7], 4
      %s34 = int_to_ptr.vmem [resolvable:$true] %s33
      %36 = dma.hbm_to_vmem [thread:$0]  %s32, 16, %s34, [#allocation8]
    $region9: #{tpu_custom_call.1} parent=1 // pred_fallthru
      _
    // Predicated region
    $region10: #{tpu_custom_call.1} parent=1 // pred_check
      _
    $region11: #{tpu_custom_call.1} parent=1 // pred_check_branch
      %38 = sbr.rel (0) target = $region13
    $region12: #{tpu_custom_call.1} parent=1 // pred_region
      %40 = vsyncadd [#allocation8], 0
      %s41 = sshll.u32 %s2, 4
      %s42 = int_to_ptr.hbm [resolvable:$true] %s41
      %s43 = sshll.u32 [#allocation9], 4
      %s44 = int_to_ptr.vmem [resolvable:$true] %s43
      %49 = dma.hbm_to_vmem [thread:$0]  %s42, 6144, %s44, [#allocation8], 384, 384, 24
    $region13: #{tpu_custom_call.1} parent=1 // pred_fallthru
      _
    // Predicated region
    $region14: #{tpu_custom_call.1} parent=1 // pred_check
      _
    $region15: #{tpu_custom_call.1} parent=1 // pred_check_branch
      %51 = sbr.rel (0) target = $region17
    $region16: #{tpu_custom_call.1} parent=1 // pred_region
      %53 = vsyncadd [#allocation11], 0
      %s54 = sshll.u32 %s3, 4
      %s55 = int_to_ptr.hbm [resolvable:$true] %s54
      %s56 = sshll.u32 [#allocation10], 4
      %s57 = int_to_ptr.vmem [resolvable:$true] %s56
      %62 = dma.hbm_to_vmem [thread:$0]  %s55, 6144, %s57, [#allocation11], 384, 384, 24
    $region17: #{tpu_custom_call.1} parent=1 // pred_fallthru
      _
    // Predicated region
    $region18: #{tpu_custom_call.1} parent=1 // pred_check
      _
    $region19: #{tpu_custom_call.1} parent=1 // pred_check_branch
      %64 = sbr.rel (0) target = $region21
    $region20: #{tpu_custom_call.1} parent=1 // pred_region
      _
    $region21: #{tpu_custom_call.1} parent=1 // pred_fallthru
      _
    // Predicated region
    $region22: #{tpu_custom_call.1} parent=1 // pred_check
      _
    $region23: #{tpu_custom_call.1} parent=1 // pred_check_branch
      %66 = sbr.rel (0) target = $region25
    $region24: #{tpu_custom_call.1} parent=1 // pred_region
      _
    $region25: #{tpu_custom_call.1} parent=1 // pred_fallthru
      _
    // Predicated region
    $region26: #{tpu_custom_call.1} parent=1 // pred_check
      _
    $region27: #{tpu_custom_call.1} parent=1 // pred_check_branch
      %68 = sbr.rel (0) target = $region29
    $region28: #{tpu_custom_call.1} parent=1 // pred_region
      %70 = dma.done [#allocation5], 16
    $region29: #{tpu_custom_call.1} parent=1 // pred_fallthru
      _
    // Predicated region
    $region30: #{tpu_custom_call.1} parent=1 // pred_check
      _
    $region31: #{tpu_custom_call.1} parent=1 // pred_check_branch
      %72 = sbr.rel (0) target = $region33
    $region32: #{tpu_custom_call.1} parent=1 // pred_region
      %74 = dma.done [#allocation8], 16
    $region33: #{tpu_custom_call.1} parent=1 // pred_fallthru
      _
    // Predicated region
    $region34: #{tpu_custom_call.1} parent=1 // pred_check
      _
    $region35: #{tpu_custom_call.1} parent=1 // pred_check_branch
      %76 = sbr.rel (0) target = $region37
    $region36: #{tpu_custom_call.1} parent=1 // pred_region
      %78 = dma.done [#allocation8], 6144
    $region37: #{tpu_custom_call.1} parent=1 // pred_fallthru
      _
    // Predicated region
    $region38: #{tpu_custom_call.1} parent=1 // pred_check
      _
    $region39: #{tpu_custom_call.1} parent=1 // pred_check_branch
      %80 = sbr.rel (0) target = $region41
    $region40: #{tpu_custom_call.1} parent=1 // pred_region
      %82 = dma.done [#allocation11], 6144
    $region41: #{tpu_custom_call.1} parent=1 // pred_fallthru
      _
    %v83 = vld [vmem:[#allocation9] sm:$0xff]
    %v84 = vld [vmem:[#allocation9 + $0x8] sm:$0xff]
    %v85 = vld [vmem:[#allocation9 + $0x10] sm:$0xff]
    %v86 = vld [vmem:[#allocation9 + $0x18] sm:$0xff]
    %v87 = vld [vmem:[#allocation9 + $0x20] sm:$0xff]
    %v88 = vld [vmem:[#allocation9 + $0x28] sm:$0xff]
    %v89 = vld [vmem:[#allocation9 + $0x30] sm:$0xff]
    %v90 = vld [vmem:[#allocation9 + $0x38] sm:$0xff]
    %v91 = vld [vmem:[#allocation9 + $0x40] sm:$0xff]
    %v92 = vld [vmem:[#allocation9 + $0x48] sm:$0xff]
    %v93 = vld [vmem:[#allocation9 + $0x50] sm:$0xff]
    %v94 = vld [vmem:[#allocation9 + $0x58] sm:$0xff]
    %v95 = vld [vmem:[#allocation9 + $0x60] sm:$0xff]
    %v96 = vld [vmem:[#allocation9 + $0x68] sm:$0xff]
    %v97 = vld [vmem:[#allocation9 + $0x70] sm:$0xff]
    %v98 = vld [vmem:[#allocation9 + $0x78] sm:$0xff]
    %v99 = vld [vmem:[#allocation9 + $0x80] sm:$0xff]
    %v100 = vld [vmem:[#allocation9 + $0x88] sm:$0xff]
    %v101 = vld [vmem:[#allocation9 + $0x90] sm:$0xff]
    %v102 = vld [vmem:[#allocation9 + $0x98] sm:$0xff]
    %v103 = vld [vmem:[#allocation9 + $0xa0] sm:$0xff]
    %v104 = vld [vmem:[#allocation9 + $0xa8] sm:$0xff]
    %v105 = vld [vmem:[#allocation9 + $0xb0] sm:$0xff]
    %v106 = vld [vmem:[#allocation9 + $0xb8] sm:$0xff]
    %v107 = vld [vmem:[#allocation9 + $0xc0] sm:$0xff]
    %v108 = vld [vmem:[#allocation9 + $0xc8] sm:$0xff]
    %v109 = vld [vmem:[#allocation9 + $0xd0] sm:$0xff]
    %v110 = vld [vmem:[#allocation9 + $0xd8] sm:$0xff]
    %v111 = vld [vmem:[#allocation9 + $0xe0] sm:$0xff]
    %v112 = vld [vmem:[#allocation9 + $0xe8] sm:$0xff]
    %v113 = vld [vmem:[#allocation9 + $0xf0] sm:$0xff]
    %v114 = vld [vmem:[#allocation9 + $0xf8] sm:$0xff]
    %v115 = vld [vmem:[#allocation9 + $0x100] sm:$0xff]
    %v116 = vld [vmem:[#allocation9 + $0x108] sm:$0xff]
    %v117 = vld [vmem:[#allocation9 + $0x110] sm:$0xff]
    %v118 = vld [vmem:[#allocation9 + $0x118] sm:$0xff]
    %v119 = vld [vmem:[#allocation9 + $0x120] sm:$0xff]
    %v120 = vld [vmem:[#allocation9 + $0x128] sm:$0xff]
    %v121 = vld [vmem:[#allocation9 + $0x130] sm:$0xff]
    %v122 = vld [vmem:[#allocation9 + $0x138] sm:$0xff]
    %v123 = vld [vmem:[#allocation9 + $0x140] sm:$0xff]
    %v124 = vld [vmem:[#allocation9 + $0x148] sm:$0xff]
    %v125 = vld [vmem:[#allocation9 + $0x150] sm:$0xff]
    %v126 = vld [vmem:[#allocation9 + $0x158] sm:$0xff]
    %v127 = vld [vmem:[#allocation9 + $0x160] sm:$0xff]
    %v128 = vld [vmem:[#allocation9 + $0x168] sm:$0xff]
    %v129 = vld [vmem:[#allocation9 + $0x170] sm:$0xff]
    %v130 = vld [vmem:[#allocation9 + $0x178] sm:$0xff]
    %v131 = vld [vmem:[#allocation10] sm:$0xff]
    %v132 = vld [vmem:[#allocation10 + $0x8] sm:$0xff]
    %v133 = vld [vmem:[#allocation10 + $0x10] sm:$0xff]
    %v134 = vld [vmem:[#allocation10 + $0x18] sm:$0xff]
    %v135 = vld [vmem:[#allocation10 + $0x20] sm:$0xff]
    %v136 = vld [vmem:[#allocation10 + $0x28] sm:$0xff]
    %v137 = vld [vmem:[#allocation10 + $0x30] sm:$0xff]
    %v138 = vld [vmem:[#allocation10 + $0x38] sm:$0xff]
    %v139 = vld [vmem:[#allocation10 + $0x40] sm:$0xff]
    %v140 = vld [vmem:[#allocation10 + $0x48] sm:$0xff]
    %v141 = vld [vmem:[#allocation10 + $0x50] sm:$0xff]
    %v142 = vld [vmem:[#allocation10 + $0x58] sm:$0xff]
    %v143 = vld [vmem:[#allocation10 + $0x60] sm:$0xff]
    %v144 = vld [vmem:[#allocation10 + $0x68] sm:$0xff]
    %v145 = vld [vmem:[#allocation10 + $0x70] sm:$0xff]
    %v146 = vld [vmem:[#allocation10 + $0x78] sm:$0xff]
    %v147 = vld [vmem:[#allocation10 + $0x80] sm:$0xff]
    %v148 = vld [vmem:[#allocation10 + $0x88] sm:$0xff]
    %v149 = vld [vmem:[#allocation10 + $0x90] sm:$0xff]
    %v150 = vld [vmem:[#allocation10 + $0x98] sm:$0xff]
    %v151 = vld [vmem:[#allocation10 + $0xa0] sm:$0xff]
    %v152 = vld [vmem:[#allocation10 + $0xa8] sm:$0xff]
    %v153 = vld [vmem:[#allocation10 + $0xb0] sm:$0xff]
    %v154 = vld [vmem:[#allocation10 + $0xb8] sm:$0xff]
    %v155 = vld [vmem:[#allocation10 + $0xc0] sm:$0xff]
    %v156 = vld [vmem:[#allocation10 + $0xc8] sm:$0xff]
    %v157 = vld [vmem:[#allocation10 + $0xd0] sm:$0xff]
    %v158 = vld [vmem:[#allocation10 + $0xd8] sm:$0xff]
    %v159 = vld [vmem:[#allocation10 + $0xe0] sm:$0xff]
    %v160 = vld [vmem:[#allocation10 + $0xe8] sm:$0xff]
    %v161 = vld [vmem:[#allocation10 + $0xf0] sm:$0xff]
    %v162 = vld [vmem:[#allocation10 + $0xf8] sm:$0xff]
    %v163 = vld [vmem:[#allocation10 + $0x100] sm:$0xff]
    %v164 = vld [vmem:[#allocation10 + $0x108] sm:$0xff]
    %v165 = vld [vmem:[#allocation10 + $0x110] sm:$0xff]
    %v166 = vld [vmem:[#allocation10 + $0x118] sm:$0xff]
    %v167 = vld [vmem:[#allocation10 + $0x120] sm:$0xff]
    %v168 = vld [vmem:[#allocation10 + $0x128] sm:$0xff]
    %v169 = vld [vmem:[#allocation10 + $0x130] sm:$0xff]
    %v170 = vld [vmem:[#allocation10 + $0x138] sm:$0xff]
    %v171 = vld [vmem:[#allocation10 + $0x140] sm:$0xff]
    %v172 = vld [vmem:[#allocation10 + $0x148] sm:$0xff]
    %v173 = vld [vmem:[#allocation10 + $0x150] sm:$0xff]
    %v174 = vld [vmem:[#allocation10 + $0x158] sm:$0xff]
    %v175 = vld [vmem:[#allocation10 + $0x160] sm:$0xff]
    %v176 = vld [vmem:[#allocation10 + $0x168] sm:$0xff]
    %v177 = vld [vmem:[#allocation10 + $0x170] sm:$0xff]
    %v178 = vld [vmem:[#allocation10 + $0x178] sm:$0xff]
    %v179 = vld [vmem:[%s4] sm:$0x7]
    %v180 = vld [vmem:[%s5] sm:$0x1]
    %v181 = vld [vmem:[#allocation4] sm:$0x1]
    %v183 = vperm.slane %v179, 0
    %v184 = vperm.slane %v179, 1
    %v185 = vperm.slane %v179, 2
    %189 = vmatpush.msra.mxu0 %v128
    %190 = vmatpush.msra.mxu0 %v125
    %191 = vmatpush.msra.mxu0 %v122
    %192 = vmatpush.msra.mxu0 %v119
    %193 = vmatpush.msra.mxu0 %v116
    %194 = vmatpush.msra.mxu0 %v113
    %195 = vmatpush.msra.mxu0 %v110
    %196 = vmatpush.msra.mxu0 %v107
    %197 = vmatpush.msra.mxu0 %v104
    %198 = vmatpush.msra.mxu0 %v101
    %199 = vmatpush.msra.mxu0 %v98
    %200 = vmatpush.msra.mxu0 %v95
    %201 = vmatpush.msra.mxu0 %v92
    %202 = vmatpush.msra.mxu0 %v89
    %203 = vmatpush.msra.mxu0 %v86
    %204 = vmatpush.msra.mxu0 %v83
    %205 = vmatmul.f32.gmra.mxu0 %v181
    %v206 = vpop.f32.mrf.mxu0
    %v207 = vadd.f32 %v183, %v206
    %208 = vdwg.mxu0
    %209 = vmatpush.msra.mxu0 %v129
    %210 = vmatpush.msra.mxu0 %v126
    %211 = vmatpush.msra.mxu0 %v123
    %212 = vmatpush.msra.mxu0 %v120
    %213 = vmatpush.msra.mxu0 %v117
    %214 = vmatpush.msra.mxu0 %v114
    %215 = vmatpush.msra.mxu0 %v111
    %216 = vmatpush.msra.mxu0 %v108
    %217 = vmatpush.msra.mxu0 %v105
    %218 = vmatpush.msra.mxu0 %v102
    %219 = vmatpush.msra.mxu0 %v99
    %220 = vmatpush.msra.mxu0 %v96
    %221 = vmatpush.msra.mxu0 %v93
    %222 = vmatpush.msra.mxu0 %v90
    %223 = vmatpush.msra.mxu0 %v87
    %224 = vmatpush.msra.mxu0 %v84
    %225 = vmatmul.f32.gmra.mxu0 %v181
    %v226 = vpop.f32.mrf.mxu0
    %v227 = vadd.f32 %v184, %v226
    %228 = vdwg.mxu0
    %229 = vmatpush.msra.mxu0 %v130
    %230 = vmatpush.msra.mxu0 %v127
    %231 = vmatpush.msra.mxu0 %v124
    %232 = vmatpush.msra.mxu0 %v121
    %233 = vmatpush.msra.mxu0 %v118
    %234 = vmatpush.msra.mxu0 %v115
    %235 = vmatpush.msra.mxu0 %v112
    %236 = vmatpush.msra.mxu0 %v109
    %237 = vmatpush.msra.mxu0 %v106
    %238 = vmatpush.msra.mxu0 %v103
    %239 = vmatpush.msra.mxu0 %v100
    %240 = vmatpush.msra.mxu0 %v97
    %241 = vmatpush.msra.mxu0 %v94
    %242 = vmatpush.msra.mxu0 %v91
    %243 = vmatpush.msra.mxu0 %v88
    %244 = vmatpush.msra.mxu0 %v85
    %245 = vmatmul.f32.gmra.mxu0 %v181
    %v246 = vpop.f32.mrf.mxu0
    %v247 = vadd.f32 %v185, %v246
    %248 = vdwg.mxu0
    %v252 = vrot.slane %v227, 7
    %v253 = vrot.slane %v247, 6
    %vm254 = vcmask 1040384
    %v255 = vsel %vm254, %v207, %v252
    %vm256 = vcmask 1041408
    %v257 = vsel %vm256, %v255, %v253
    %v259 = vlaneseq
    %vm260 = vcmp.ge.s32.totalorder %v259, 0
    %vm261 = vcmp.lt.s32.totalorder %v259, 384
    %vm262 = vmand %vm260, %vm261
    %263 = vst.msk [vmem:[#allocation2] sm:$0x7] %vm262, %v257
    %v264 = vld [vmem:[#allocation7] sm:$0x1]
    %265 = vst [vmem:[#allocation3] sm:$0x1] %v264
    %v266 = vld [vmem:[#allocation3] sm:$0x1]
    %v267 = vld [vmem:[#allocation2] sm:$0x7]
    %268 = vmatpush.msra.mxu0 %v176
    %269 = vmatpush.msra.mxu0 %v173
    %270 = vmatpush.msra.mxu0 %v170
    %271 = vmatpush.msra.mxu0 %v167
    %272 = vmatpush.msra.mxu0 %v164
    %273 = vmatpush.msra.mxu0 %v161
    %274 = vmatpush.msra.mxu0 %v158
    %275 = vmatpush.msra.mxu0 %v155
    %276 = vmatpush.msra.mxu0 %v152
    %277 = vmatpush.msra.mxu0 %v149
    %278 = vmatpush.msra.mxu0 %v146
    %279 = vmatpush.msra.mxu0 %v143
    %280 = vmatpush.msra.mxu0 %v140
    %281 = vmatpush.msra.mxu0 %v137
    %282 = vmatpush.msra.mxu0 %v134
    %283 = vmatpush.msra.mxu0 %v131
    %284 = vmatmul.f32.gmra.mxu0 %v266
    %v285 = vpop.f32.mrf.mxu0
    %v286 = vadd.f32 0.0, %v285
    %287 = vdwg.mxu0
    %288 = vmatpush.msra.mxu0 %v177
    %289 = vmatpush.msra.mxu0 %v174
    %290 = vmatpush.msra.mxu0 %v171
    %291 = vmatpush.msra.mxu0 %v168
    %292 = vmatpush.msra.mxu0 %v165
    %293 = vmatpush.msra.mxu0 %v162
    %294 = vmatpush.msra.mxu0 %v159
    %295 = vmatpush.msra.mxu0 %v156
    %296 = vmatpush.msra.mxu0 %v153
    %297 = vmatpush.msra.mxu0 %v150
    %298 = vmatpush.msra.mxu0 %v147
    %299 = vmatpush.msra.mxu0 %v144
    %300 = vmatpush.msra.mxu0 %v141
    %301 = vmatpush.msra.mxu0 %v138
    %302 = vmatpush.msra.mxu0 %v135
    %303 = vmatpush.msra.mxu0 %v132
    %304 = vmatmul.f32.gmra.mxu0 %v266
    %v305 = vpop.f32.mrf.mxu0
    %v306 = vadd.f32 0.0, %v305
    %307 = vdwg.mxu0
    %308 = vmatpush.msra.mxu0 %v178
    %309 = vmatpush.msra.mxu0 %v175
    %310 = vmatpush.msra.mxu0 %v172
    %311 = vmatpush.msra.mxu0 %v169
    %312 = vmatpush.msra.mxu0 %v166
    %313 = vmatpush.msra.mxu0 %v163
    %314 = vmatpush.msra.mxu0 %v160
    %315 = vmatpush.msra.mxu0 %v157
    %316 = vmatpush.msra.mxu0 %v154
    %317 = vmatpush.msra.mxu0 %v151
    %318 = vmatpush.msra.mxu0 %v148
    %319 = vmatpush.msra.mxu0 %v145
    %320 = vmatpush.msra.mxu0 %v142
    %321 = vmatpush.msra.mxu0 %v139
    %322 = vmatpush.msra.mxu0 %v136
    %323 = vmatpush.msra.mxu0 %v133
    %324 = vmatmul.f32.gmra.mxu0 %v266
    %v325 = vpop.f32.mrf.mxu0
    %v326 = vadd.f32 0.0, %v325
    %327 = vdwg.mxu0
    %v328 = vadd.f32 %v267, %v286
    %v329 = vxor.u32 %v328, 2147483648
    %v330 = vmul.f32 %v329, 1.442695
    %v331 = vpow.pop %v330
    %v332 = vadd.f32 %v331, 1.0
    %v333 = vrcp.pop %v332
    %v334 = vmul.f32 %v332, %v333
    %v335 = vsub.f32 1.0, %v334
    %v336 = vmul.f32 %v333, %v335
    %v337 = vadd.f32 %v333, %v336
    %vm338 = vweird.f32 %v332
    %vm339 = vweird.f32 %v333
    %vm340 = vmor %vm338, %vm339
    %v341 = vsel %vm340, %v333, %v337
    %v342 = vand.u32 2147483647, %v332
    %vm343 = vcmp.eq.f32.partialorder %v342, 8.507059e+37
    %v344 = vand.u32 %v332, 2147483648
    %v345 = vor.u32 1.1754944e-38, %v344
    %v346 = vsel %vm343, %v345, %v341
    %v347 = vmul.f32 1.0, %v346
    %v349 = vrot.slane %v267, 1
    %v351 = vadd.f32 %v349, %v306
    %v352 = vxor.u32 %v351, 2147483648
    %v353 = vmul.f32 %v352, 1.442695
    %v354 = vpow.pop %v353
    %v355 = vadd.f32 %v354, 1.0
    %v356 = vrcp.pop %v355
    %v357 = vmul.f32 %v355, %v356
    %v358 = vsub.f32 1.0, %v357
    %v359 = vmul.f32 %v356, %v358
    %v360 = vadd.f32 %v356, %v359
    %vm361 = vweird.f32 %v355
    %vm362 = vweird.f32 %v356
    %vm363 = vmor %vm361, %vm362
    %v364 = vsel %vm363, %v356, %v360
    %v365 = vand.u32 2147483647, %v355
    %vm366 = vcmp.eq.f32.partialorder %v365, 8.507059e+37
    %v367 = vand.u32 %v355, 2147483648
    %v368 = vor.u32 1.1754944e-38, %v367
    %v369 = vsel %vm366, %v368, %v364
    %v370 = vmul.f32 1.0, %v369
    %v371 = vadd.f32 %v326, %v180
    %v372 = vmul.f32 %v347, %v371
    %v373 = vrot.slane %v267, 2
    %v375 = vadd.f32 %v373, %v372
    %v376 = vtanh.pop %v375
    %v377 = vsub.f32 1.0, %v370
    %v378 = vmul.f32 %v377, %v376
    %v379 = vmul.f32 %v370, %v266
    %v380 = vadd.f32 %v378, %v379
    %381 = vst [vmem:[#allocation3] sm:$0x1] %v380
    %382 = vst [vmem:[#allocation12] sm:$0x1] %v380
    // Predicated region
    $region42: #{tpu_custom_call.1} parent=1 // pred_check
      _
    $region43: #{tpu_custom_call.1} parent=1 // pred_check_branch
      %384 = sbr.rel (0) target = $region45
    $region44: #{tpu_custom_call.1} parent=1 // pred_region
      %386 = vsyncadd [#allocation6], 0
      %s388 = sshll.u32 [#allocation12], 4
      %s389 = int_to_ptr.vmem [resolvable:$true] %s388
      %s390 = sshll.u32 %s6, 4
      %s391 = int_to_ptr.hbm [resolvable:$true] %s390
      %393 = dma.vmem_to_hbm [thread:$0]  %s389, 16, %s391, [#allocation6]
    $region45: #{tpu_custom_call.1} parent=1 // pred_fallthru
      _
    // Predicated region
    $region46: #{tpu_custom_call.1} parent=1 // pred_check
      _
    $region47: #{tpu_custom_call.1} parent=1 // pred_check_branch
      %395 = sbr.rel (0) target = $region49
    $region48: #{tpu_custom_call.1} parent=1 // pred_region
      %397 = dma.done [#allocation6], 16
    $region49: #{tpu_custom_call.1} parent=1 // pred_fallthru
      _
    %398 = vsyncpa [#allocation5], 1
    %399 = vsyncpa [#allocation8], 1
    %400 = vsyncpa [#allocation11], 1
    %401 = vsyncpa [#allocation6], 1

</llo_original>
